<compile_context>
chip_gen: v7x
topology: tpu7x:2x2x1
jax: 0.10.0
libtpu: 0.0.40
codegen_flags: <defaults>
</compile_context>

<pallas_src>
import jax
import jax.numpy as jnp
from jax.experimental import pallas as pl
from jax.experimental.pallas import tpu as pltpu

_LANE = 128          # last block dim multiple
_BF16_SUBLANE = 16   # bf16 packs 16 rows per sublane tile
_MiB = 1024 * 1024


def _round_up(x: int, m: int) -> int:
    return ((x + m - 1) // m) * m


def _cdiv(a: int, b: int) -> int:
    return -(-a // b)


def _vmem_capacity_bytes() -> int:
    """Physical VMEM per TensorCore for this chip generation."""
    try:
        return int(pltpu.get_tpu_info().vmem_capacity_bytes)
    except Exception:
        return 64 * _MiB   # conservative fallback (v7x per-core size)


# --------------------------------------------------------------------------
# Kernels
# --------------------------------------------------------------------------
def _decoder_cached_kernel(z_ref, w1_ref, b1_ref, w2_ref, b2_ref,
                           w3_ref, b3_ref, o_ref, h2_ref):
    """grid = (batch tiles, output-column tiles).

    The column axis iterates innermost and sequentially ("arbitrary"), so the
    hidden activations for the current batch tile are computed once (n == 0)
    and cached in a bf16 VMEM scratch; every column step only runs layer 3.
    All matmuls are bf16 x bf16 with f32 accumulation on the MXU.
    """
    n = pl.program_id(1)

    @pl.when(n == 0)
    def _():
        h1 = jnp.dot(z_ref[...], w1_ref[...],
                     preferred_element_type=jnp.float32)
        h1 = jnp.maximum(h1 + b1_ref[...], 0.0)                      # ReLU
        h2 = jnp.dot(h1.astype(jnp.bfloat16), w2_ref[...],
                     preferred_element_type=jnp.float32)
        h2 = jnp.maximum(h2 + b2_ref[...], 0.0)                      # ReLU
        h2_ref[...] = h2.astype(h2_ref.dtype)

    out = jnp.dot(h2_ref[...], w3_ref[...],
                  preferred_element_type=jnp.float32)
    o_ref[...] = (out + b3_ref[...]).astype(o_ref.dtype)


def _decoder_recompute_kernel(z_ref, w1_ref, b1_ref, w2_ref, b2_ref,
                              w3_ref, b3_ref, o_ref):
    """Recomputes the (cheap) hidden layers per output-column tile so both
    grid axes can be "parallel" (megacore-friendly on v7x small-batch decode)
    and no cross-iteration scratch is needed."""
    h1 = jnp.dot(z_ref[...], w1_ref[...], preferred_element_type=jnp.float32)
    h1 = jnp.maximum(h1 + b1_ref[...], 0.0)                          # ReLU
    h2 = jnp.dot(h1.astype(jnp.bfloat16), w2_ref[...],
                 preferred_element_type=jnp.float32)
    h2 = jnp.maximum(h2 + b2_ref[...], 0.0)                          # ReLU
    out = jnp.dot(h2.astype(jnp.bfloat16), w3_ref[...],
                  preferred_element_type=jnp.float32)
    o_ref[...] = (out + b3_ref[...]).astype(o_ref.dtype)


# --------------------------------------------------------------------------
# One-time weight preparation (hoisted out of the forward)
# --------------------------------------------------------------------------
def prepare_decoder_params(params, *, n_channels, seq_len,
                           tile_n=512, max_tile_b=256):
    """Pad/cast the decoder weights ONCE; returns a dict for decoder_forward.

    Weights are (in_features, out_features) — transposed vs. PyTorch — so the
    kernel computes y = x @ W + b.
    """
    w1, b1, w2, b2, w3, b3 = params
    d_in, H = w1.shape
    d_out = w3.shape[1]
    assert d_out == n_channels * seq_len

    # 256 fills one full v6e/v7x MXU pass when H is large; degrades to 128
    # alignment for small H (and is harmless extra padding on v5e).
    feat_align = 256 if H >= 256 else _LANE
    d_in_p = _round_up(d_in, _LANE)
    h_p = _round_up(H, feat_align)

    # Pick the W3 column tile so resident W1/W2 + a double-buffered W3 tile
    # stay within ~half of this generation's *physical* VMEM.
    cap = _vmem_capacity_bytes()
    weight_budget = cap // 2
    tile_n = _round_up(min(tile_n, _round_up(d_out, _LANE)), _LANE)
    resident = (d_in_p * h_p + h_p * h_p) * 2 + 2 * h_p * 4
    while (tile_n > _LANE and
           resident + 2 * (h_p * tile_n * 2 + tile_n * 4) > weight_budget):
        tile_n //= 2
    tile_n = max(_round_up(tile_n, _LANE), _LANE)
    d_out_p = _round_up(d_out, tile_n)

    f32, bf16 = jnp.float32, jnp.bfloat16

    def pad2(a, rows, cols, dt):
        a = jnp.asarray(a, dt)
        return jnp.pad(a, ((0, rows - a.shape[0]), (0, cols - a.shape[1])))

    return dict(
        w1=pad2(w1, d_in_p, h_p, bf16), b1=pad2(b1, 1, h_p, f32),
        w2=pad2(w2, h_p, h_p, bf16),    b2=pad2(b2, 1, h_p, f32),
        w3=pad2(w3, h_p, d_out_p, bf16), b3=pad2(b3, 1, d_out_p, f32),
        d_in=d_in, d_in_p=d_in_p, hidden=H, h_p=h_p,
        d_out=d_out, d_out_p=d_out_p, tile_n=tile_n,
        max_tile_b=max_tile_b, n_channels=n_channels, seq_len=seq_len,
    )


# --------------------------------------------------------------------------
# Forward
# --------------------------------------------------------------------------
def decoder_forward(z_latent, prepared, *, out_dtype=jnp.float32):
    """Fused decoder MLP; returns (B, channels, seq_len)."""
    B, d_in = z_latent.shape
    assert d_in == prepared["d_in"]
    d_in_p, h_p = prepared["d_in_p"], prepared["h_p"]
    d_out, d_out_p = prepared["d_out"], prepared["d_out_p"]
    tile_n = prepared["tile_n"]
    C, S = prepared["n_channels"], prepared["seq_len"]
    max_tile_b = prepared["max_tile_b"]

    # ---- Batch tiling: minimal padding, rounded to bf16 sublane packing.
    n_b_tiles = max(1, _cdiv(B, max_tile_b))
    tile_b = _round_up(_cdiv(B, n_b_tiles), _BF16_SUBLANE)
    n_col_tiles = d_out_p // tile_n

    # ---- Kernel variant: recompute hidden layers per column tile when that
    # costs <= 25% of layer-3 FLOPs (or there is only one column tile).
    # Recompute -> fully parallel grid (both v7x TCs even at small batch),
    # no h2 scratch; cache -> column axis must stay "arbitrary".
    hidden_flops = d_in_p * h_p + h_p * h_p
    layer3_flops_per_row = h_p * d_out_p
    use_cache = (n_col_tiles > 1 and
                 hidden_flops * (n_col_tiles - 1) > layer3_flops_per_row // 4)

    # ---- Generation-aware VMEM sizing (includes the f32 temporaries).
    cap = _vmem_capacity_bytes()
    budget = int(cap * 0.75)          # ~48 MiB on v7x, ~96 MiB on v5e/v6e

    def vmem_est(tb):
        est = (2 * tb * d_in_p * 2                              # z (2x, bf16)
               + 2 * tb * tile_n * 4                            # out (2x, f32)
               + (d_in_p * h_p + h_p * h_p) * 2 + 2 * h_p * 4   # resident W1/W2
               + 2 * (h_p * tile_n * 2 + tile_n * 4)            # W3/b3 tiles (2x)
               + 2 * tb * h_p * 4                               # f32 h1/h2 temps
               + tb * tile_n * 4)                               # f32 out temp
        if use_cache:
            est += tb * h_p * 2                                 # h2 bf16 scratch
        return est

    while tile_b > _BF16_SUBLANE and vmem_est(tile_b) > budget:
        tile_b = _round_up(tile_b // 2, _BF16_SUBLANE)
    n_b_tiles = _cdiv(B, tile_b)
    b_p = n_b_tiles * tile_b

    est = vmem_est(tile_b)
    vmem_limit = None
    if est > 16 * _MiB:     # conservative scoped default (v5e = 16 MiB)
        vmem_limit = min(max(int(est * 1.25), est + 2 * _MiB), budget)

    # ---- Only z is padded per call (weights were prepared once).
    zp = jnp.pad(z_latent.astype(jnp.bfloat16),
                 ((0, b_p - B), (0, d_in_p - d_in)))

    grid = (n_b_tiles, n_col_tiles)

    def _wspec(shape, index_map, single_buffer):
        # Replicated weights (constant index_map) only need one VMEM buffer.
        if single_buffer and hasattr(pl, "Buffered"):
            try:
                return pl.BlockSpec(shape, index_map,
                                    pipeline_mode=pl.Buffered(1))
            except TypeError:
                pass
        return pl.BlockSpec(shape, index_map)

    out_spec = pl.BlockSpec((tile_b, tile_n), lambda i, n: (i, n))

    if use_cache:
        kernel = _decoder_cached_kernel
        scratch = [pltpu.VMEM((tile_b, h_p), jnp.bfloat16)]
        semantics = ("parallel", "arbitrary")
    else:
        kernel = _decoder_recompute_kernel
        scratch = []
        semantics = ("parallel", "parallel")

    # Advisory cost estimate (W3 is re-streamed once per batch tile).
    # TODO(synk): for very large batches, a column-outer grid with a
    # full-batch h2 cache would cut W3 HBM reads to exactly one pass.
    l12_mult = 1 if use_cache else n_col_tiles
    flops = 2 * b_p * hidden_flops * l12_mult + 2 * b_p * h_p * d_out_p
    out_itemsize = 2 if out_dtype == jnp.bfloat16 else 4
    bytes_accessed = (zp.size * 2
                      + prepared["w1"].size * 2 + prepared["w2"].size * 2
                      + prepared["w3"].size * 2 * n_b_tiles
                      + (prepared["b1"].size + prepared["b2"].size) * 4
                      + prepared["b3"].size * 4 * n_b_tiles
                      + b_p * d_out_p * out_itemsize)
    cost = pl.CostEstimate(flops=int(flops), transcendentals=0,
                           bytes_accessed=int(bytes_accessed))

    def call(single_buffer):
        in_specs = [
            pl.BlockSpec((tile_b, d_in_p), lambda i, n: (i, 0)),          # z
            _wspec((d_in_p, h_p), lambda i, n: (0, 0), single_buffer),    # W1
            _wspec((1, h_p), lambda i, n: (0, 0), single_buffer),         # b1
            _wspec((h_p, h_p), lambda i, n: (0, 0), single_buffer),       # W2
            _wspec((1, h_p), lambda i, n: (0, 0), single_buffer),         # b2
            pl.BlockSpec((h_p, tile_n), lambda i, n: (0, n)),             # W3
            pl.BlockSpec((1, tile_n), lambda i, n: (0, n)),               # b3
        ]
        return pl.pallas_call(
            kernel,
            out_shape=jax.ShapeDtypeStruct((b_p, d_out_p), out_dtype),
            grid_spec=pltpu.PrefetchScalarGridSpec(
                num_scalar_prefetch=0,
                grid=grid,
                in_specs=in_specs,
                out_specs=out_spec,
                scratch_shapes=scratch,
            ),
            compiler_params=pltpu.CompilerParams(
                dimension_semantics=semantics,
                vmem_limit_bytes=vmem_limit),
            cost_estimate=cost,
        )(zp, prepared["w1"], prepared["b1"], prepared["w2"],
          prepared["b2"], prepared["w3"], prepared["b3"])

    try:
        flat = call(single_buffer=True)
    except pltpu.LoweringException:
        # Narrow fallback: only if pipeline_mode=pl.Buffered(1) cannot lower.
        flat = call(single_buffer=False)

    # torch.reshape(x, (-1, channels, seq_len)); skip the slice when unpadded.
    if b_p == B and d_out_p == d_out:
        return flat.reshape(B, C, S)
    return flat[:B, :d_out].reshape(B, C, S)


# --------------------------------------------------------------------------
# Init + pure-JAX reference
# --------------------------------------------------------------------------
def init_decoder_params(key, bottleneck_dim, hidden_dim, n_channels, seq_len):
    """Deterministic init mimicking nn.Linear's U(-1/sqrt(fan_in), +) scheme.
    Weights stored as (in_features, out_features)."""
    d_out = n_channels * seq_len
    dims = [(bottleneck_dim, hidden_dim),
            (hidden_dim, hidden_dim),
            (hidden_dim, d_out)]
    params = []
    for fan_in, fan_out in dims:
        key, kw_, kb = jax.random.split(key, 3)
        bound = 1.0 / jnp.sqrt(float(fan_in))
        w = jax.random.uniform(kw_, (fan_in, fan_out), jnp.float32,
                               minval=-bound, maxval=bound)
        b = jax.random.uniform(kb, (1, fan_out), jnp.float32,
                               minval=-bound, maxval=bound)
        params.extend([w, b])
    return tuple(params)


def decoder_reference(z_latent, params):
    """Pure-JAX f32 reference of the same forward pass."""
    w1, b1, w2, b2, w3, b3 = params
    h = jnp.maximum(z_latent @ w1 + b1, 0.0)
    h = jnp.maximum(h @ w2 + b2, 0.0)
    return h @ w3 + b3


if __name__ == "__main__":
    # Small shapes consistent with the module's forward:
    #   bottleneck_dim=16, hidden_dim=32, n_channels=4, seq_len=8, batch=8
    B = 8
    bottleneck_dim = 16
    hidden_dim = 32
    n_channels = 4
    seq_len = 8

    key = jax.random.PRNGKey(0)
    key, kz = jax.random.split(key)
    z_latent = jax.random.normal(kz, (B, bottleneck_dim), jnp.float32)

    params = init_decoder_params(key, bottleneck_dim, hidden_dim,
                                 n_channels, seq_len)

    # TODO(synk): params_to_decoder=True branch (NormalizationLayer1D + concat)
    # is not implemented; default path (params_to_decoder=False) only.

    # One-time weight pad/cast, then run the fused kernel.
    prepared = prepare_decoder_params(params, n_channels=n_channels,
                                      seq_len=seq_len)
    out = decoder_forward(z_latent, prepared)
    out = jax.block_until_ready(out)

    # Sanity check vs. pure-f32 JAX reference (kernel runs bf16 on the MXU,
    # so use a tolerance compatible with bf16 rounding).
    ref = decoder_reference(z_latent, params).reshape(B, n_channels, seq_len)
    assert out.shape == (B, n_channels, seq_len)
    assert jnp.allclose(out, ref, atol=3e-2, rtol=3e-2)

    print("KERNEL_OK")
</pallas_src>

<mosaic_0001>
module attributes {stable_mosaic.version = 11 : i64} {
  func.func @_decoder_recompute_kernel(%arg0: i32, %arg1: i32, %arg2: memref<16x128xbf16, #tpu.memory_space<vmem>>, %arg3: memref<128x128xbf16, #tpu.memory_space<vmem>>, %arg4: memref<1x128xf32, #tpu.memory_space<vmem>>, %arg5: memref<128x128xbf16, #tpu.memory_space<vmem>>, %arg6: memref<1x128xf32, #tpu.memory_space<vmem>>, %arg7: memref<128x128xbf16, #tpu.memory_space<vmem>>, %arg8: memref<1x128xf32, #tpu.memory_space<vmem>>, %arg9: memref<16x128xf32, #tpu.memory_space<vmem>>) attributes {dimension_semantics = [#tpu.dimension_semantics<parallel>, #tpu.dimension_semantics<parallel>], iteration_bounds = array<i64: 1, 1>, scalar_prefetch = 0 : i64, scratch_operands = 0 : i64, tpu.core_type = #tpu.core_type<tc>, window_params = [{transform_indices = @transform_0, window_bounds = array<i64: 16, 128>}, {pipeline_mode = #tpu.pipeline_mode<synchronous>, transform_indices = @transform_1, window_bounds = array<i64: 128, 128>}, {pipeline_mode = #tpu.pipeline_mode<synchronous>, transform_indices = @transform_2, window_bounds = array<i64: 1, 128>}, {pipeline_mode = #tpu.pipeline_mode<synchronous>, transform_indices = @transform_3, window_bounds = array<i64: 128, 128>}, {pipeline_mode = #tpu.pipeline_mode<synchronous>, transform_indices = @transform_4, window_bounds = array<i64: 1, 128>}, {transform_indices = @transform_5, window_bounds = array<i64: 128, 128>}, {transform_indices = @transform_6, window_bounds = array<i64: 1, 128>}, {transform_indices = @transform_7, window_bounds = array<i64: 16, 128>}]} {
    %c0 = arith.constant 0 : index
    %c0_0 = arith.constant 0 : index
    %0 = vector.load %arg2[%c0, %c0_0] : memref<16x128xbf16, #tpu.memory_space<vmem>>, vector<16x128xbf16>
    %c0_1 = arith.constant 0 : index
    %c0_2 = arith.constant 0 : index
    %1 = vector.load %arg3[%c0_1, %c0_2] : memref<128x128xbf16, #tpu.memory_space<vmem>>, vector<128x128xbf16>
    %cst = arith.constant dense<0.000000e+00> : vector<16x128xf32>
    %2 = tpu.matmul %0, %1, %cst {dimension_numbers = #tpu.dot_dimension_numbers<[1], [0], [0], [1], [0, 0, 1, 1], [], []>} : vector<16x128xbf16>, vector<128x128xbf16>, vector<16x128xf32> -> vector<16x128xf32>
    %c0_3 = arith.constant 0 : index
    %c0_4 = arith.constant 0 : index
    %3 = vector.load %arg4[%c0_3, %c0_4] : memref<1x128xf32, #tpu.memory_space<vmem>>, vector<1x128xf32>
    %4 = vector.broadcast %3 : vector<1x128xf32> to vector<16x128xf32>
    %5 = arith.addf %2, %4 : vector<16x128xf32>
    %cst_5 = arith.constant 0.000000e+00 : f32
    %6 = vector.broadcast %cst_5 : f32 to vector<16x128xf32>
    %7 = arith.maximumf %5, %6 : vector<16x128xf32>
    %8 = arith.truncf %7 : vector<16x128xf32> to vector<16x128xbf16>
    %c0_6 = arith.constant 0 : index
    %c0_7 = arith.constant 0 : index
    %9 = vector.load %arg5[%c0_6, %c0_7] : memref<128x128xbf16, #tpu.memory_space<vmem>>, vector<128x128xbf16>
    %cst_8 = arith.constant dense<0.000000e+00> : vector<16x128xf32>
    %10 = tpu.matmul %8, %9, %cst_8 {dimension_numbers = #tpu.dot_dimension_numbers<[1], [0], [0], [1], [0, 0, 1, 1], [], []>} : vector<16x128xbf16>, vector<128x128xbf16>, vector<16x128xf32> -> vector<16x128xf32>
    %c0_9 = arith.constant 0 : index
    %c0_10 = arith.constant 0 : index
    %11 = vector.load %arg6[%c0_9, %c0_10] : memref<1x128xf32, #tpu.memory_space<vmem>>, vector<1x128xf32>
    %12 = vector.broadcast %11 : vector<1x128xf32> to vector<16x128xf32>
    %13 = arith.addf %10, %12 : vector<16x128xf32>
    %cst_11 = arith.constant 0.000000e+00 : f32
    %14 = vector.broadcast %cst_11 : f32 to vector<16x128xf32>
    %15 = arith.maximumf %13, %14 : vector<16x128xf32>
    %16 = arith.truncf %15 : vector<16x128xf32> to vector<16x128xbf16>
    %c0_12 = arith.constant 0 : index
    %c0_13 = arith.constant 0 : index
    %17 = vector.load %arg7[%c0_12, %c0_13] : memref<128x128xbf16, #tpu.memory_space<vmem>>, vector<128x128xbf16>
    %cst_14 = arith.constant dense<0.000000e+00> : vector<16x128xf32>
    %18 = tpu.matmul %16, %17, %cst_14 {dimension_numbers = #tpu.dot_dimension_numbers<[1], [0], [0], [1], [0, 0, 1, 1], [], []>} : vector<16x128xbf16>, vector<128x128xbf16>, vector<16x128xf32> -> vector<16x128xf32>
    %c0_15 = arith.constant 0 : index
    %c0_16 = arith.constant 0 : index
    %19 = vector.load %arg8[%c0_15, %c0_16] : memref<1x128xf32, #tpu.memory_space<vmem>>, vector<1x128xf32>
    %20 = vector.broadcast %19 : vector<1x128xf32> to vector<16x128xf32>
    %21 = arith.addf %18, %20 : vector<16x128xf32>
    %c0_17 = arith.constant 0 : index
    %c0_18 = arith.constant 0 : index
    %22 = vector.load %arg9[%c0_17, %c0_18] : memref<16x128xf32, #tpu.memory_space<vmem>>, vector<16x128xf32>
    tpu.vector_store %arg9[%c0_17, %c0_18], %21 {strides = array<i32>} : memref<16x128xf32, #tpu.memory_space<vmem>>, vector<16x128xf32>,
    return
  }
  func.func @transform_0(%arg0: i32, %arg1: i32) -> (i32, i32) {
    %c0_i32 = arith.constant 0 : i32
    %c0_i32_0 = arith.constant 0 : i32
    return %arg0, %c0_i32 : i32, i32
  }
  func.func @transform_1(%arg0: i32, %arg1: i32) -> (i32, i32) {
    %c0_i32 = arith.constant 0 : i32
    %c0_i32_0 = arith.constant 0 : i32
    %c0_i32_1 = arith.constant 0 : i32
    return %c0_i32, %c0_i32_0 : i32, i32
  }
  func.func @transform_2(%arg0: i32, %arg1: i32) -> (i32, i32) {
    %c0_i32 = arith.constant 0 : i32
    %c0_i32_0 = arith.constant 0 : i32
    %c0_i32_1 = arith.constant 0 : i32
    return %c0_i32, %c0_i32_0 : i32, i32
  }
  func.func @transform_3(%arg0: i32, %arg1: i32) -> (i32, i32) {
    %c0_i32 = arith.constant 0 : i32
    %c0_i32_0 = arith.constant 0 : i32
    %c0_i32_1 = arith.constant 0 : i32
    return %c0_i32, %c0_i32_0 : i32, i32
  }
  func.func @transform_4(%arg0: i32, %arg1: i32) -> (i32, i32) {
    %c0_i32 = arith.constant 0 : i32
    %c0_i32_0 = arith.constant 0 : i32
    %c0_i32_1 = arith.constant 0 : i32
    return %c0_i32, %c0_i32_0 : i32, i32
  }
  func.func @transform_5(%arg0: i32, %arg1: i32) -> (i32, i32) {
    %c0_i32 = arith.constant 0 : i32
    %c0_i32_0 = arith.constant 0 : i32
    return %c0_i32, %arg1 : i32, i32
  }
  func.func @transform_6(%arg0: i32, %arg1: i32) -> (i32, i32) {
    %c0_i32 = arith.constant 0 : i32
    %c0_i32_0 = arith.constant 0 : i32
    return %c0_i32, %arg1 : i32, i32
  }
  func.func @transform_7(%arg0: i32, %arg1: i32) -> (i32, i32) {
    %c0_i32 = arith.constant 0 : i32
    return %arg0, %arg1 : i32, i32
  }
}

</mosaic_0001>

<llo_original>
// kernel: tpu_custom_call.1
$region0: #{tpu_custom_call.1}
  #allocation0 [shape = 'u32[]', space=smem, size = 0x4, offset = 0x4, fixed_abs, tag = 'smem constant byte address 0x4 - core index']
  #allocation1 [shape = 'u32[144,128]{1,0:T(1,128)}', space=vmem, size = 0x12000, scoped, tag = 'internal scratch']
  %s0 = inlined_call_operand.hbm [shape: bf16[16,128], index: 0, kind: input, shape index: {}]
  %s1 = inlined_call_operand.hbm [shape: bf16[128,128], index: 1, kind: input, shape index: {}]
  %s2 = inlined_call_operand.vmem [shape: f32[1,128], index: 2, kind: input, shape index: {}]
  %s3 = inlined_call_operand.hbm [shape: bf16[128,128], index: 3, kind: input, shape index: {}]
  %s4 = inlined_call_operand.vmem [shape: f32[1,128], index: 4, kind: input, shape index: {}]
  %s5 = inlined_call_operand.hbm [shape: bf16[128,128], index: 5, kind: input, shape index: {}]
  %s6 = inlined_call_operand.vmem [shape: f32[1,128], index: 6, kind: input, shape index: {}]
  %s7 = inlined_call_operand.hbm [shape: f32[16,128], index: 7, kind: output, shape index: {}]
  %s8 = sld [smem:[#allocation0]]
  $region54: #{tpu_custom_call.1} parent=0
    _
  %s10 = ssub.s32 1, %s8
  %s11 = scalar_select 0, %s10, %s8
  $region1: #{tpu_custom_call.1} parent=0
    #allocation2 [shape = 'u8[4096]{0}', space=vmem, size = 0x1000, scoped, tag = 'input window, operand 0, single buffered']
    #allocation3 [shape = 's32[1]{0}', space=sflag, size = 0x4, scoped, tag = 'scoped memory for tpu_custom_call.1']
    #allocation4 [shape = 's32[1]{0}', space=sflag, size = 0x4, scoped, tag = 'scoped memory for tpu_custom_call.1']
    #allocation5 [shape = 'u8[32768]{0}', space=vmem, size = 0x8000, scoped, tag = 'input window, operand 1, single buffered']
    #allocation6 [shape = 's32[1]{0}', space=sflag, size = 0x4, scoped, tag = 'scoped memory for tpu_custom_call.1']
    #allocation7 [shape = 'u8[32768]{0}', space=vmem, size = 0x8000, scoped, tag = 'input window, operand 3, single buffered']
    #allocation8 [shape = 'u8[32768]{0}', space=vmem, size = 0x8000, scoped, tag = 'input window, operand 5, single buffered']
    #allocation9 [shape = 's32[1]{0}', space=sflag, size = 0x4, scoped, tag = 'scoped memory for tpu_custom_call.1']
    #allocation10 [shape = 'u8[8192]{0}', space=vmem, size = 0x2000, scoped, tag = 'output window, operand 0, single buffered']
    %12 = vsyncpa [#allocation3], 0
    %13 = vsyncpa [#allocation6], 0
    %14 = vsyncpa [#allocation9], 0
    %15 = vsyncpa [#allocation4], 0
    // Predicated region
    $region2: #{tpu_custom_call.1} parent=1 // pred_check
      _
    $region3: #{tpu_custom_call.1} parent=1 // pred_check_branch
      %17 = sbr.rel (0) target = $region5
    $region4: #{tpu_custom_call.1} parent=1 // pred_region
      %s19 = ssub.s32 128, 128
      %20 = vsyncadd [#allocation3], %s19
      %s21 = sshll.u32 [#allocation2], 4
      %s22 = int_to_ptr.vmem [resolvable:$true] %s21
      %27 = dma.hbm_to_vmem [thread:$0]  %s0, 128, %s22, [#allocation3], 64, 64, 4
    $region5: #{tpu_custom_call.1} parent=1 // pred_fallthru
      _
    // Predicated region
    $region6: #{tpu_custom_call.1} parent=1 // pred_check
      _
    $region7: #{tpu_custom_call.1} parent=1 // pred_check_branch
      %29 = sbr.rel (0) target = $region9
    $region8: #{tpu_custom_call.1} parent=1 // pred_region
      %s31 = ssub.s32 1024, 1024
      %32 = vsyncadd [#allocation6], %s31
      %s33 = sshll.u32 [#allocation5], 4
      %s34 = int_to_ptr.vmem [resolvable:$true] %s33
      %39 = dma.hbm_to_vmem [thread:$0]  %s1, 1024, %s34, [#allocation6], 64, 64, 4
    $region9: #{tpu_custom_call.1} parent=1 // pred_fallthru
      _
    // Predicated region
    $region10: #{tpu_custom_call.1} parent=1 // pred_check
      _
    $region11: #{tpu_custom_call.1} parent=1 // pred_check_branch
      %41 = sbr.rel (0) target = $region13
    $region12: #{tpu_custom_call.1} parent=1 // pred_region
      _
    $region13: #{tpu_custom_call.1} parent=1 // pred_fallthru
      _
    // Predicated region
    $region14: #{tpu_custom_call.1} parent=1 // pred_check
      _
    $region15: #{tpu_custom_call.1} parent=1 // pred_check_branch
      %43 = sbr.rel (0) target = $region17
    $region16: #{tpu_custom_call.1} parent=1 // pred_region
      %s45 = ssub.s32 1024, 1024
      %46 = vsyncadd [#allocation6], %s45
      %s47 = sshll.u32 [#allocation7], 4
      %s48 = int_to_ptr.vmem [resolvable:$true] %s47
      %53 = dma.hbm_to_vmem [thread:$0]  %s3, 1024, %s48, [#allocation6], 64, 64, 4
    $region17: #{tpu_custom_call.1} parent=1 // pred_fallthru
      _
    // Predicated region
    $region18: #{tpu_custom_call.1} parent=1 // pred_check
      _
    $region19: #{tpu_custom_call.1} parent=1 // pred_check_branch
      %55 = sbr.rel (0) target = $region21
    $region20: #{tpu_custom_call.1} parent=1 // pred_region
      _
    $region21: #{tpu_custom_call.1} parent=1 // pred_fallthru
      _
    // Predicated region
    $region22: #{tpu_custom_call.1} parent=1 // pred_check
      _
    $region23: #{tpu_custom_call.1} parent=1 // pred_check_branch
      %57 = sbr.rel (0) target = $region25
    $region24: #{tpu_custom_call.1} parent=1 // pred_region
      %s59 = ssub.s32 1024, 1024
      %60 = vsyncadd [#allocation9], %s59
      %s61 = sshll.u32 [#allocation8], 4
      %s62 = int_to_ptr.vmem [resolvable:$true] %s61
      %67 = dma.hbm_to_vmem [thread:$0]  %s5, 1024, %s62, [#allocation9], 64, 64, 4
    $region25: #{tpu_custom_call.1} parent=1 // pred_fallthru
      _
    // Predicated region
    $region26: #{tpu_custom_call.1} parent=1 // pred_check
      _
    $region27: #{tpu_custom_call.1} parent=1 // pred_check_branch
      %69 = sbr.rel (0) target = $region29
    $region28: #{tpu_custom_call.1} parent=1 // pred_region
      _
    $region29: #{tpu_custom_call.1} parent=1 // pred_fallthru
      _
    // Predicated region
    $region30: #{tpu_custom_call.1} parent=1 // pred_check
      _
    $region31: #{tpu_custom_call.1} parent=1 // pred_check_branch
      %71 = sbr.rel (0) target = $region33
    $region32: #{tpu_custom_call.1} parent=1 // pred_region
      %72 = dma.done [#allocation3], 128
    $region33: #{tpu_custom_call.1} parent=1 // pred_fallthru
      _
    // Predicated region
    $region34: #{tpu_custom_call.1} parent=1 // pred_check
      _
    $region35: #{tpu_custom_call.1} parent=1 // pred_check_branch
      %74 = sbr.rel (0) target = $region37
    $region36: #{tpu_custom_call.1} parent=1 // pred_region
      %75 = dma.done [#allocation6], 1024
    $region37: #{tpu_custom_call.1} parent=1 // pred_fallthru
      _
    // Predicated region
    $region38: #{tpu_custom_call.1} parent=1 // pred_check
      _
    $region39: #{tpu_custom_call.1} parent=1 // pred_check_branch
      %77 = sbr.rel (0) target = $region41
    $region40: #{tpu_custom_call.1} parent=1 // pred_region
      %78 = dma.done [#allocation6], 1024
    $region41: #{tpu_custom_call.1} parent=1 // pred_fallthru
      _
    // Predicated region
    $region42: #{tpu_custom_call.1} parent=1 // pred_check
      _
    $region43: #{tpu_custom_call.1} parent=1 // pred_check_branch
      %80 = sbr.rel (0) target = $region45
    $region44: #{tpu_custom_call.1} parent=1 // pred_region
      %81 = dma.done [#allocation9], 1024
    $region45: #{tpu_custom_call.1} parent=1 // pred_fallthru
      _
    %v83 = vld [vmem:[#allocation2] sm:$0xf]
    %v84 = vld [vmem:[#allocation2 + $0x4] sm:$0xf]
    %v85 = vld [vmem:[#allocation5] sm:$0xf]
    %v86 = vld [vmem:[#allocation5 + $0x4] sm:$0xf]
    %v87 = vld [vmem:[#allocation5 + $0x8] sm:$0xf]
    %v88 = vld [vmem:[#allocation5 + $0xc] sm:$0xf]
    %v89 = vld [vmem:[#allocation5 + $0x10] sm:$0xf]
    %v90 = vld [vmem:[#allocation5 + $0x14] sm:$0xf]
    %v91 = vld [vmem:[#allocation5 + $0x18] sm:$0xf]
    %v92 = vld [vmem:[#allocation5 + $0x1c] sm:$0xf]
    %v93 = vld [vmem:[#allocation5 + $0x20] sm:$0xf]
    %v94 = vld [vmem:[#allocation5 + $0x24] sm:$0xf]
    %v95 = vld [vmem:[#allocation5 + $0x28] sm:$0xf]
    %v96 = vld [vmem:[#allocation5 + $0x2c] sm:$0xf]
    %v97 = vld [vmem:[#allocation5 + $0x30] sm:$0xf]
    %v98 = vld [vmem:[#allocation5 + $0x34] sm:$0xf]
    %v99 = vld [vmem:[#allocation5 + $0x38] sm:$0xf]
    %v100 = vld [vmem:[#allocation5 + $0x3c] sm:$0xf]
    %v101 = vld [vmem:[%s2] sm:$0x1]
    %v103 = vlaneseq
    %v104 = vshrl.u32 %v103, 7
    %v105 = vsub.s32 0, %v104
    %v106 = vrot.slane %v101, %v105
    %v110 = vunpack.c.l.b16 %v83
    %v111 = vunpack.c.l.b16 %v84
    %v112 = vpack.c.b16 %v111, %v110
    %v130 = vunpack.c.l.b16 %v85
    %v131 = vunpack.c.l.b16 %v86
    %v132 = vunpack.c.l.b16 %v87
    %v133 = vunpack.c.l.b16 %v88
    %v134 = vunpack.c.l.b16 %v89
    %v135 = vunpack.c.l.b16 %v90
    %v136 = vunpack.c.l.b16 %v91
    %v137 = vunpack.c.l.b16 %v92
    %v138 = vunpack.c.l.b16 %v93
    %v139 = vunpack.c.l.b16 %v94
    %v140 = vunpack.c.l.b16 %v95
    %v141 = vunpack.c.l.b16 %v96
    %v142 = vunpack.c.l.b16 %v97
    %v143 = vunpack.c.l.b16 %v98
    %v144 = vunpack.c.l.b16 %v99
    %v145 = vunpack.c.l.b16 %v100
    %v146 = vpack.c.b16 %v131, %v130
    %v147 = vpack.c.b16 %v133, %v132
    %v148 = vpack.c.b16 %v135, %v134
    %v149 = vpack.c.b16 %v137, %v136
    %v150 = vpack.c.b16 %v139, %v138
    %v151 = vpack.c.b16 %v141, %v140
    %v152 = vpack.c.b16 %v143, %v142
    %v153 = vpack.c.b16 %v145, %v144
    %162 = vmatprep.subr.bf16.mxu0 0
    %163 = vmatpush1.bf16.msra.mxu0 %v146
    %164 = vmatprep.subr.bf16.mxu0 0
    %165 = vmatpush1.bf16.msra.mxu0 %v147
    %166 = vmatprep.subr.bf16.mxu0 0
    %167 = vmatpush1.bf16.msra.mxu0 %v148
    %168 = vmatprep.subr.bf16.mxu0 0
    %169 = vmatpush1.bf16.msra.mxu0 %v149
    %170 = vmatprep.subr.bf16.mxu0 0
    %171 = vmatpush1.bf16.msra.mxu0 %v150
    %172 = vmatprep.subr.bf16.mxu0 0
    %173 = vmatpush1.bf16.msra.mxu0 %v151
    %174 = vmatprep.subr.bf16.mxu0 0
    %175 = vmatpush1.bf16.msra.mxu0 %v152
    %176 = vmatprep.subr.bf16.mxu0 0
    %177 = vmatpush1.bf16.msra.mxu0 %v153
    %178 = vmatprep.subr.bf16.mxu0 0
    %179 = vmatpush1.bf16.msra.mxu0 0
    %180 = vmatprep.subr.bf16.mxu0 0
    %181 = vmatpush1.bf16.msra.mxu0 0
    %182 = vmatprep.subr.bf16.mxu0 0
    %183 = vmatpush1.bf16.msra.mxu0 0
    %184 = vmatprep.subr.bf16.mxu0 0
    %185 = vmatpush1.bf16.msra.mxu0 0
    %186 = vmatprep.subr.bf16.mxu0 0
    %187 = vmatpush1.bf16.msra.mxu0 0
    %188 = vmatprep.subr.bf16.mxu0 0
    %189 = vmatpush1.bf16.msra.mxu0 0
    %190 = vmatprep.subr.bf16.mxu0 0
    %191 = vmatpush1.bf16.msra.mxu0 0
    %192 = vmatprep.subr.bf16.mxu0 0
    %193 = vmatpush1.bf16.msra.mxu0 0
    %194 = vmatprep.mubr.bf16.mxu0 0
    %195 = vmatmul.mubr.bf16.gmra.mrb[0].mxu0 %v112
    %v196 = vpop.f32.mrb[0].mxu0
    %v197 = vadd.f32 %v106, %v196
    %v198 = vpop.f32.mrb[0].mxu0
    %v199 = vpop.f32.mrb[0].mxu0
    %v200 = vadd.f32 %v106, %v199
    %v201 = vpop.f32.mrb[0].mxu0
    %202 = vdwg.mxu0
    %v203 = vmax.f32 %v197, 0.0
    %v204 = vmax.f32 %v200, 0.0
    %v205 = vpack.c.bf16 %v204, %v203
    %v206 = vld [vmem:[#allocation7] sm:$0xf]
    %v207 = vld [vmem:[#allocation7 + $0x4] sm:$0xf]
    %v208 = vld [vmem:[#allocation7 + $0x8] sm:$0xf]
    %v209 = vld [vmem:[#allocation7 + $0xc] sm:$0xf]
    %v210 = vld [vmem:[#allocation7 + $0x10] sm:$0xf]
    %v211 = vld [vmem:[#allocation7 + $0x14] sm:$0xf]
    %v212 = vld [vmem:[#allocation7 + $0x18] sm:$0xf]
    %v213 = vld [vmem:[#allocation7 + $0x1c] sm:$0xf]
    %v214 = vld [vmem:[#allocation7 + $0x20] sm:$0xf]
    %v215 = vld [vmem:[#allocation7 + $0x24] sm:$0xf]
    %v216 = vld [vmem:[#allocation7 + $0x28] sm:$0xf]
    %v217 = vld [vmem:[#allocation7 + $0x2c] sm:$0xf]
    %v218 = vld [vmem:[#allocation7 + $0x30] sm:$0xf]
    %v219 = vld [vmem:[#allocation7 + $0x34] sm:$0xf]
    %v220 = vld [vmem:[#allocation7 + $0x38] sm:$0xf]
    %v221 = vld [vmem:[#allocation7 + $0x3c] sm:$0xf]
    %v222 = vld [vmem:[%s4] sm:$0x1]
    %v224 = vlaneseq
    %v225 = vshrl.u32 %v224, 7
    %v226 = vsub.s32 0, %v225
    %v227 = vrot.slane %v222, %v226
    %v245 = vunpack.c.l.b16 %v206
    %v246 = vunpack.c.l.b16 %v207
    %v247 = vunpack.c.l.b16 %v208
    %v248 = vunpack.c.l.b16 %v209
    %v249 = vunpack.c.l.b16 %v210
    %v250 = vunpack.c.l.b16 %v211
    %v251 = vunpack.c.l.b16 %v212
    %v252 = vunpack.c.l.b16 %v213
    %v253 = vunpack.c.l.b16 %v214
    %v254 = vunpack.c.l.b16 %v215
    %v255 = vunpack.c.l.b16 %v216
    %v256 = vunpack.c.l.b16 %v217
    %v257 = vunpack.c.l.b16 %v218
    %v258 = vunpack.c.l.b16 %v219
    %v259 = vunpack.c.l.b16 %v220
    %v260 = vunpack.c.l.b16 %v221
    %v261 = vpack.c.b16 %v246, %v245
    %v262 = vpack.c.b16 %v248, %v247
    %v263 = vpack.c.b16 %v250, %v249
    %v264 = vpack.c.b16 %v252, %v251
    %v265 = vpack.c.b16 %v254, %v253
    %v266 = vpack.c.b16 %v256, %v255
    %v267 = vpack.c.b16 %v258, %v257
    %v268 = vpack.c.b16 %v260, %v259
    %277 = vmatprep.subr.bf16.mxu0 0
    %278 = vmatpush1.bf16.msra.mxu0 %v261
    %279 = vmatprep.subr.bf16.mxu0 0
    %280 = vmatpush1.bf16.msra.mxu0 %v262
    %281 = vmatprep.subr.bf16.mxu0 0
    %282 = vmatpush1.bf16.msra.mxu0 %v263
    %283 = vmatprep.subr.bf16.mxu0 0
    %284 = vmatpush1.bf16.msra.mxu0 %v264
    %285 = vmatprep.subr.bf16.mxu0 0
    %286 = vmatpush1.bf16.msra.mxu0 %v265
    %287 = vmatprep.subr.bf16.mxu0 0
    %288 = vmatpush1.bf16.msra.mxu0 %v266
    %289 = vmatprep.subr.bf16.mxu0 0
    %290 = vmatpush1.bf16.msra.mxu0 %v267
    %291 = vmatprep.subr.bf16.mxu0 0
    %292 = vmatpush1.bf16.msra.mxu0 %v268
    %293 = vmatprep.subr.bf16.mxu0 0
    %294 = vmatpush1.bf16.msra.mxu0 0
    %295 = vmatprep.subr.bf16.mxu0 0
    %296 = vmatpush1.bf16.msra.mxu0 0
    %297 = vmatprep.subr.bf16.mxu0 0
    %298 = vmatpush1.bf16.msra.mxu0 0
    %299 = vmatprep.subr.bf16.mxu0 0
    %300 = vmatpush1.bf16.msra.mxu0 0
    %301 = vmatprep.subr.bf16.mxu0 0
    %302 = vmatpush1.bf16.msra.mxu0 0
    %303 = vmatprep.subr.bf16.mxu0 0
    %304 = vmatpush1.bf16.msra.mxu0 0
    %305 = vmatprep.subr.bf16.mxu0 0
    %306 = vmatpush1.bf16.msra.mxu0 0
    %307 = vmatprep.subr.bf16.mxu0 0
    %308 = vmatpush1.bf16.msra.mxu0 0
    %309 = vmatprep.mubr.bf16.mxu0 0
    %310 = vmatmul.mubr.bf16.gmra.mrb[0].mxu0 %v205
    %v311 = vpop.f32.mrb[0].mxu0
    %v312 = vadd.f32 %v227, %v311
    %v313 = vpop.f32.mrb[0].mxu0
    %v314 = vpop.f32.mrb[0].mxu0
    %v315 = vadd.f32 %v227, %v314
    %v316 = vpop.f32.mrb[0].mxu0
    %317 = vdwg.mxu0
    %v318 = vmax.f32 %v312, 0.0
    %v319 = vmax.f32 %v315, 0.0
    %v320 = vpack.c.bf16 %v319, %v318
    %v321 = vld [vmem:[#allocation8] sm:$0xf]
    %v322 = vld [vmem:[#allocation8 + $0x4] sm:$0xf]
    %v323 = vld [vmem:[#allocation8 + $0x8] sm:$0xf]
    %v324 = vld [vmem:[#allocation8 + $0xc] sm:$0xf]
    %v325 = vld [vmem:[#allocation8 + $0x10] sm:$0xf]
    %v326 = vld [vmem:[#allocation8 + $0x14] sm:$0xf]
    %v327 = vld [vmem:[#allocation8 + $0x18] sm:$0xf]
    %v328 = vld [vmem:[#allocation8 + $0x1c] sm:$0xf]
    %v329 = vld [vmem:[#allocation8 + $0x20] sm:$0xf]
    %v330 = vld [vmem:[#allocation8 + $0x24] sm:$0xf]
    %v331 = vld [vmem:[#allocation8 + $0x28] sm:$0xf]
    %v332 = vld [vmem:[#allocation8 + $0x2c] sm:$0xf]
    %v333 = vld [vmem:[#allocation8 + $0x30] sm:$0xf]
    %v334 = vld [vmem:[#allocation8 + $0x34] sm:$0xf]
    %v335 = vld [vmem:[#allocation8 + $0x38] sm:$0xf]
    %v336 = vld [vmem:[#allocation8 + $0x3c] sm:$0xf]
    %v337 = vld [vmem:[%s6] sm:$0x1]
    %v339 = vlaneseq
    %v340 = vshrl.u32 %v339, 7
    %v341 = vsub.s32 0, %v340
    %v342 = vrot.slane %v337, %v341
    %v360 = vunpack.c.l.b16 %v321
    %v361 = vunpack.c.l.b16 %v322
    %v362 = vunpack.c.l.b16 %v323
    %v363 = vunpack.c.l.b16 %v324
    %v364 = vunpack.c.l.b16 %v325
    %v365 = vunpack.c.l.b16 %v326
    %v366 = vunpack.c.l.b16 %v327
    %v367 = vunpack.c.l.b16 %v328
    %v368 = vunpack.c.l.b16 %v329
    %v369 = vunpack.c.l.b16 %v330
    %v370 = vunpack.c.l.b16 %v331
    %v371 = vunpack.c.l.b16 %v332
    %v372 = vunpack.c.l.b16 %v333
    %v373 = vunpack.c.l.b16 %v334
    %v374 = vunpack.c.l.b16 %v335
    %v375 = vunpack.c.l.b16 %v336
    %v376 = vpack.c.b16 %v361, %v360
    %v377 = vpack.c.b16 %v363, %v362
    %v378 = vpack.c.b16 %v365, %v364
    %v379 = vpack.c.b16 %v367, %v366
    %v380 = vpack.c.b16 %v369, %v368
    %v381 = vpack.c.b16 %v371, %v370
    %v382 = vpack.c.b16 %v373, %v372
    %v383 = vpack.c.b16 %v375, %v374
    %392 = vmatprep.subr.bf16.mxu0 0
    %393 = vmatpush1.bf16.msra.mxu0 %v376
    %394 = vmatprep.subr.bf16.mxu0 0
    %395 = vmatpush1.bf16.msra.mxu0 %v377
    %396 = vmatprep.subr.bf16.mxu0 0
    %397 = vmatpush1.bf16.msra.mxu0 %v378
    %398 = vmatprep.subr.bf16.mxu0 0
    %399 = vmatpush1.bf16.msra.mxu0 %v379
    %400 = vmatprep.subr.bf16.mxu0 0
    %401 = vmatpush1.bf16.msra.mxu0 %v380
    %402 = vmatprep.subr.bf16.mxu0 0
    %403 = vmatpush1.bf16.msra.mxu0 %v381
    %404 = vmatprep.subr.bf16.mxu0 0
    %405 = vmatpush1.bf16.msra.mxu0 %v382
    %406 = vmatprep.subr.bf16.mxu0 0
    %407 = vmatpush1.bf16.msra.mxu0 %v383
    %408 = vmatprep.subr.bf16.mxu0 0
    %409 = vmatpush1.bf16.msra.mxu0 0
    %410 = vmatprep.subr.bf16.mxu0 0
    %411 = vmatpush1.bf16.msra.mxu0 0
    %412 = vmatprep.subr.bf16.mxu0 0
    %413 = vmatpush1.bf16.msra.mxu0 0
    %414 = vmatprep.subr.bf16.mxu0 0
    %415 = vmatpush1.bf16.msra.mxu0 0
    %416 = vmatprep.subr.bf16.mxu0 0
    %417 = vmatpush1.bf16.msra.mxu0 0
    %418 = vmatprep.subr.bf16.mxu0 0
    %419 = vmatpush1.bf16.msra.mxu0 0
    %420 = vmatprep.subr.bf16.mxu0 0
    %421 = vmatpush1.bf16.msra.mxu0 0
    %422 = vmatprep.subr.bf16.mxu0 0
    %423 = vmatpush1.bf16.msra.mxu0 0
    %424 = vmatprep.mubr.bf16.mxu0 0
    %425 = vmatmul.mubr.bf16.gmra.mrb[0].mxu0 %v320
    %v426 = vpop.f32.mrb[0].mxu0
    %v427 = vadd.f32 %v342, %v426
    %v428 = vpop.f32.mrb[0].mxu0
    %v429 = vpop.f32.mrb[0].mxu0
    %v430 = vadd.f32 %v342, %v429
    %v431 = vpop.f32.mrb[0].mxu0
    %432 = vdwg.mxu0
    %433 = vst [vmem:[#allocation10] sm:$0xff] %v427
    %434 = vst [vmem:[#allocation10 + $0x8] sm:$0xff] %v430
    // Predicated region
    $region46: #{tpu_custom_call.1} parent=1 // pred_check
      _
    $region47: #{tpu_custom_call.1} parent=1 // pred_check_branch
      %436 = sbr.rel (0) target = $region49
    $region48: #{tpu_custom_call.1} parent=1 // pred_region
      %s438 = ssub.s32 256, 256
      %439 = vsyncadd [#allocation4], %s438
      %s440 = sshll.u32 [#allocation10], 4
      %s441 = int_to_ptr.vmem [resolvable:$true] %s440
      %446 = dma.vmem_to_hbm [thread:$0]  %s441, 256, %s7, [#allocation4], 128, 128, 8
    $region49: #{tpu_custom_call.1} parent=1 // pred_fallthru
      _
    // Predicated region
    $region50: #{tpu_custom_call.1} parent=1 // pred_check
      _
    $region51: #{tpu_custom_call.1} parent=1 // pred_check_branch
      %448 = sbr.rel (0) target = $region53
    $region52: #{tpu_custom_call.1} parent=1 // pred_region
      %449 = dma.done [#allocation4], 256
    $region53: #{tpu_custom_call.1} parent=1 // pred_fallthru
      _
    %450 = vsyncpa [#allocation3], 1
    %451 = vsyncpa [#allocation6], 1
    %452 = vsyncpa [#allocation9], 1
    %453 = vsyncpa [#allocation4], 1

</llo_original>
